<compile_context>
chip_gen: v7x
topology: tpu7x:2x2x1
jax: 0.10.0
libtpu: 0.0.40
codegen_flags: <defaults>
</compile_context>

<pallas_src>
import functools

import jax
import jax.numpy as jnp
from jax import lax
from jax.experimental import pallas as pl
from jax.experimental.pallas import tpu as pltpu


# ----------------------------- kernels ------------------------------------


def _stats_kernel(x_ref, mean_ref, var_ref, sum_sc, sq_sc, *, inv_count):
    """Pass 1: accumulate per-channel sum / sumsq; finalize mean & biased var."""
    n = pl.program_id(0)
    m = pl.program_id(1)

    @pl.when(jnp.logical_and(n == 0, m == 0))
    def _init():
        sum_sc[...] = jnp.zeros_like(sum_sc)
        sq_sc[...] = jnp.zeros_like(sq_sc)

    # x_ref block: (1, C, t_hw). Cast is fused into the per-tile reduction.
    x = x_ref[0].astype(jnp.float32)                       # (C, t_hw)
    sum_sc[...] += jnp.sum(x, axis=1, keepdims=True)       # (C, 1)
    sq_sc[...] += jnp.sum(x * x, axis=1, keepdims=True)    # (C, 1)

    @pl.when(jnp.logical_and(n == pl.num_programs(0) - 1,
                             m == pl.num_programs(1) - 1))
    def _finalize():
        mean = sum_sc[...] * inv_count
        var = sq_sc[...] * inv_count - mean * mean          # biased variance
        mean_ref[...] = mean
        var_ref[...] = jnp.maximum(var, 0.0)


def _normalize_kernel(x_ref, mean_ref, var_ref, out_ref, *, epsilon):
    """Pass 2: out = (x - mean) * rsqrt(var + eps), per channel."""
    mean = mean_ref[...]                                   # (C, 1) f32
    inv_std = lax.rsqrt(var_ref[...] + epsilon)            # (C, 1), EUP
    x = x_ref[0].astype(jnp.float32)                       # (C, t_hw)
    out_ref[0] = ((x - mean) * inv_std).astype(out_ref.dtype)


# ----------------------------- wrapper -------------------------------------


def _pick_hw_tile(hw, c, per_buffer_bytes=2 << 20):
    """Largest multiple-of-128 divisor of hw with C*t_hw*4B <= per_buffer_bytes;
    falls back to the full extent (always legal for a full-dim block)."""
    cap = max(128, (per_buffer_bytes // (4 * max(c, 1))) // 128 * 128)
    best = None
    t = 128
    while t <= min(hw, cap):
        if hw % t == 0:
            best = t
        t += 128
    return best if best is not None else hw


def _bn_pallas(x, epsilon):
    """x: (N, C, H, W). Returns (out NCHW, mean (C,), biased var (C,))."""
    N, C, H, W = x.shape
    HW = H * W
    M = N * HW
    x3 = x.reshape(N, C, HW)          # free view of NCHW — no transpose

    t_hw = _pick_hw_tile(HW, C)
    grid = (N, HW // t_hw)

    # Note: C < 8 sublanes (e.g. the C=4 demo) wastes vreg sublanes but is a
    # legal full-dim block on all generations.
    x_spec = pl.BlockSpec((1, C, t_hw), lambda n, m: (n, 0, m))
    cvec_spec = pl.BlockSpec((C, 1), lambda n, m: (0, 0))

    stats = functools.partial(_stats_kernel, inv_count=1.0 / M)
    mean, var = pl.pallas_call(
        stats,
        out_shape=(
            jax.ShapeDtypeStruct((C, 1), jnp.float32),
            jax.ShapeDtypeStruct((C, 1), jnp.float32),
        ),
        grid=grid,
        in_specs=[x_spec],
        out_specs=(cvec_spec, cvec_spec),
        scratch_shapes=[
            pltpu.VMEM((C, 1), jnp.float32),   # running sum
            pltpu.VMEM((C, 1), jnp.float32),   # running sum of squares
        ],
        compiler_params=pltpu.CompilerParams(
            dimension_semantics=("arbitrary", "arbitrary")
        ),
    )(x3)

    norm = functools.partial(_normalize_kernel, epsilon=epsilon)
    out3 = pl.pallas_call(
        norm,
        out_shape=jax.ShapeDtypeStruct((N, C, HW), x.dtype),
        grid=grid,
        in_specs=[x_spec, cvec_spec, cvec_spec],
        out_specs=x_spec,
        compiler_params=pltpu.CompilerParams(
            dimension_semantics=("parallel", "parallel")
        ),
    )(x3, mean, var)

    return out3.reshape(N, C, H, W), mean[:, 0], var[:, 0]


@functools.partial(jax.jit, static_argnames=("epsilon", "momentum"))
def _bn_train_forward(x, runningmean, runningvar, *, epsilon, momentum):
    out, mean, var = _bn_pallas(x, epsilon)
    new_rm = (1.0 - momentum) * mean + momentum * runningmean
    new_rv = (1.0 - momentum) * var + momentum * runningvar
    return out, new_rm, new_rv


class BatchNormm2D:
    """JAX/Pallas port of the PyTorch BatchNormm2D module (training forward)."""

    def __init__(self, num_channels, epsilon=1e-5, momentum=0.9, rescale=True):
        self.num_channels = num_channels
        self.epsilon = float(epsilon)
        self.momentum = float(momentum)
        self.rescale = rescale
        if self.rescale:
            # Matches nn.Parameter(torch.ones/zeros); the reference forward
            # never applies them, so neither do we.
            self.gamma = jnp.ones((num_channels,), jnp.float32)
            self.beta = jnp.zeros((num_channels,), jnp.float32)
        self.runningmean = jnp.zeros((num_channels,), jnp.float32)
        self.runningvar = jnp.ones((num_channels,), jnp.float32)

    def __call__(self, x):
        assert x.ndim == 4
        assert x.shape[1] == self.num_channels

        out, new_rm, new_rv = _bn_train_forward(
            x, self.runningmean, self.runningvar,
            epsilon=self.epsilon, momentum=self.momentum,
        )
        # Buffer update (side effect in the PyTorch module).
        self.runningmean = new_rm
        self.runningvar = new_rv

        if self.rescale:
            return out
        # Reference module implicitly returns None when rescale is False.
        return None


# ----------------------------- self-test ------------------------------------


def _reference_bn(x, epsilon):
    mean = jnp.mean(x, axis=(0, 2, 3), keepdims=True)
    var = jnp.mean((x - mean) ** 2, axis=(0, 2, 3), keepdims=True)
    return (x - mean) / jnp.sqrt(var + epsilon)


if __name__ == "__main__":
    key = jax.random.PRNGKey(0)
    N, C, H, W = 2, 4, 16, 16
    x = jax.random.normal(key, (N, C, H, W), dtype=jnp.float32)

    bn = BatchNormm2D(num_channels=C)
    out = bn(x)
    out = jax.block_until_ready(out)

    ref = _reference_bn(x, bn.epsilon)
    assert out.shape == (N, C, H, W)
    assert jnp.allclose(out, ref, atol=1e-4, rtol=1e-4)

    # Running-stat update check (biased var, module's EMA convention).
    ref_mean = jnp.mean(x, axis=(0, 2, 3))
    ref_var = jnp.mean((x - ref_mean[None, :, None, None]) ** 2, axis=(0, 2, 3))
    exp_rm = (1.0 - bn.momentum) * ref_mean
    exp_rv = (1.0 - bn.momentum) * ref_var + bn.momentum * jnp.ones((C,))
    assert jnp.allclose(bn.runningmean, exp_rm, atol=1e-4, rtol=1e-4)
    assert jnp.allclose(bn.runningvar, exp_rv, atol=1e-4, rtol=1e-4)

    print("KERNEL_OK")
</pallas_src>

<mosaic_0001>
module attributes {stable_mosaic.version = 11 : i64} {
  func.func @_normalize_kernel(%arg0: i32, %arg1: i32, %arg2: memref<1x4x256xf32, #tpu.memory_space<vmem>>, %arg3: memref<4x1xf32, #tpu.memory_space<vmem>>, %arg4: memref<4x1xf32, #tpu.memory_space<vmem>>, %arg5: memref<1x4x256xf32, #tpu.memory_space<vmem>>) attributes {dimension_semantics = [#tpu.dimension_semantics<parallel>, #tpu.dimension_semantics<parallel>], iteration_bounds = array<i64: 2, 1>, scalar_prefetch = 0 : i64, scratch_operands = 0 : i64, tpu.core_type = #tpu.core_type<tc>, window_params = [{transform_indices = @transform_0, window_bounds = array<i64: 1, 4, 256>}, {pipeline_mode = #tpu.pipeline_mode<synchronous>, transform_indices = @transform_1, window_bounds = array<i64: 4, 1>}, {pipeline_mode = #tpu.pipeline_mode<synchronous>, transform_indices = @transform_2, window_bounds = array<i64: 4, 1>}, {transform_indices = @transform_3, window_bounds = array<i64: 1, 4, 256>}]} {
    %c0 = arith.constant 0 : index
    %c0_0 = arith.constant 0 : index
    %0 = vector.load %arg3[%c0, %c0_0] : memref<4x1xf32, #tpu.memory_space<vmem>>, vector<4x1xf32>
    %c0_1 = arith.constant 0 : index
    %c0_2 = arith.constant 0 : index
    %1 = vector.load %arg4[%c0_1, %c0_2] : memref<4x1xf32, #tpu.memory_space<vmem>>, vector<4x1xf32>
    %cst = arith.constant 9.99999974E-6 : f32
    %2 = vector.broadcast %cst : f32 to vector<4x1xf32>
    %3 = arith.addf %1, %2 : vector<4x1xf32>
    %4 = math.rsqrt %3 : vector<4x1xf32>
    %c0_3 = arith.constant 0 : index
    %c0_4 = arith.constant 0 : index
    %c0_5 = arith.constant 0 : index
    %5 = vector.load %arg2[%c0_3, %c0_4, %c0_5] : memref<1x4x256xf32, #tpu.memory_space<vmem>>, vector<1x4x256xf32>
    %6 = vector.shape_cast %5 : vector<1x4x256xf32> to vector<4x256xf32>
    %7 = vector.broadcast %0 : vector<4x1xf32> to vector<4x256xf32>
    %8 = arith.subf %6, %7 : vector<4x256xf32>
    %9 = vector.broadcast %4 : vector<4x1xf32> to vector<4x256xf32>
    %10 = arith.mulf %8, %9 : vector<4x256xf32>
    %c0_6 = arith.constant 0 : index
    %c0_7 = arith.constant 0 : index
    %c0_8 = arith.constant 0 : index
    %11 = vector.load %arg5[%c0_6, %c0_7, %c0_8] : memref<1x4x256xf32, #tpu.memory_space<vmem>>, vector<1x4x256xf32>
    %12 = vector.shape_cast %11 : vector<1x4x256xf32> to vector<4x256xf32>
    %13 = vector.shape_cast %10 : vector<4x256xf32> to vector<1x4x256xf32>
    tpu.vector_store %arg5[%c0_6, %c0_7, %c0_8], %13 {strides = array<i32>} : memref<1x4x256xf32, #tpu.memory_space<vmem>>, vector<1x4x256xf32>,
    return
  }
  func.func @transform_0(%arg0: i32, %arg1: i32) -> (i32, i32, i32) {
    %c0_i32 = arith.constant 0 : i32
    %c0_i32_0 = arith.constant 0 : i32
    return %arg0, %c0_i32, %arg1 : i32, i32, i32
  }
  func.func @transform_1(%arg0: i32, %arg1: i32) -> (i32, i32) {
    %c0_i32 = arith.constant 0 : i32
    %c0_i32_0 = arith.constant 0 : i32
    %c0_i32_1 = arith.constant 0 : i32
    return %c0_i32, %c0_i32_0 : i32, i32
  }
  func.func @transform_2(%arg0: i32, %arg1: i32) -> (i32, i32) {
    %c0_i32 = arith.constant 0 : i32
    %c0_i32_0 = arith.constant 0 : i32
    %c0_i32_1 = arith.constant 0 : i32
    return %c0_i32, %c0_i32_0 : i32, i32
  }
  func.func @transform_3(%arg0: i32, %arg1: i32) -> (i32, i32, i32) {
    %c0_i32 = arith.constant 0 : i32
    %c0_i32_0 = arith.constant 0 : i32
    return %arg0, %c0_i32, %arg1 : i32, i32, i32
  }
}

module attributes {stable_mosaic.version = 11 : i64} {
  func.func @_stats_kernel(%arg0: i32, %arg1: i32, %arg2: memref<1x4x256xf32, #tpu.memory_space<vmem>>, %arg3: memref<4x1xf32, #tpu.memory_space<vmem>>, %arg4: memref<4x1xf32, #tpu.memory_space<vmem>>, %arg5: memref<4x1xf32, #tpu.memory_space<vmem>>, %arg6: memref<4x1xf32, #tpu.memory_space<vmem>>) attributes {dimension_semantics = [#tpu.dimension_semantics<arbitrary>, #tpu.dimension_semantics<arbitrary>], iteration_bounds = array<i64: 2, 1>, scalar_prefetch = 0 : i64, scratch_operands = 2 : i64, tpu.core_type = #tpu.core_type<tc>, window_params = [{transform_indices = @transform_0, window_bounds = array<i64: 1, 4, 256>}, {pipeline_mode = #tpu.pipeline_mode<synchronous>, transform_indices = @transform_1, window_bounds = array<i64: 4, 1>}, {pipeline_mode = #tpu.pipeline_mode<synchronous>, transform_indices = @transform_2, window_bounds = array<i64: 4, 1>}]} {
    %c0_i32 = arith.constant 0 : i32
    %0 = arith.cmpi eq, %arg0, %c0_i32 : i32
    %c0_i32_0 = arith.constant 0 : i32
    %1 = arith.cmpi eq, %arg1, %c0_i32_0 : i32
    %2 = arith.andi %0, %1 : i1
    %3 = arith.extui %2 : i1 to i32
    %c0_i32_1 = arith.constant 0 : i32
    %4 = arith.cmpi ne, %3, %c0_i32_1 : i32
    scf.if %4 {
      %cst_15 = arith.constant 0.000000e+00 : f32
      %23 = vector.broadcast %cst_15 : f32 to vector<4x1xf32>
      %c0_16 = arith.constant 0 : index
      %c0_17 = arith.constant 0 : index
      %24 = vector.load %arg5[%c0_16, %c0_17] : memref<4x1xf32, #tpu.memory_space<vmem>>, vector<4x1xf32>
      tpu.vector_store %arg5[%c0_16, %c0_17], %23 {strides = array<i32>} : memref<4x1xf32, #tpu.memory_space<vmem>>, vector<4x1xf32>,
      %cst_18 = arith.constant 0.000000e+00 : f32
      %25 = vector.broadcast %cst_18 : f32 to vector<4x1xf32>
      %c0_19 = arith.constant 0 : index
      %c0_20 = arith.constant 0 : index
      %26 = vector.load %arg6[%c0_19, %c0_20] : memref<4x1xf32, #tpu.memory_space<vmem>>, vector<4x1xf32>
      tpu.vector_store %arg6[%c0_19, %c0_20], %25 {strides = array<i32>} : memref<4x1xf32, #tpu.memory_space<vmem>>, vector<4x1xf32>,
    } else {
    }
    %c0 = arith.constant 0 : index
    %c0_2 = arith.constant 0 : index
    %c0_3 = arith.constant 0 : index
    %5 = vector.load %arg2[%c0, %c0_2, %c0_3] : memref<1x4x256xf32, #tpu.memory_space<vmem>>, vector<1x4x256xf32>
    %6 = vector.shape_cast %5 : vector<1x4x256xf32> to vector<4x256xf32>
    %c0_4 = arith.constant 0 : index
    %c0_5 = arith.constant 0 : index
    %7 = vector.load %arg5[%c0_4, %c0_5] : memref<4x1xf32, #tpu.memory_space<vmem>>, vector<4x1xf32>
    %cst = arith.constant dense<0.000000e+00> : vector<4xf32>
    %8 = vector.multi_reduction <add>, %6, %cst [1] : vector<4x256xf32> to vector<4xf32>
    %9 = vector.shape_cast %8 : vector<4xf32> to vector<4x1xf32>
    %10 = arith.addf %7, %9 : vector<4x1xf32>
    %c0_6 = arith.constant 0 : index
    %c0_7 = arith.constant 0 : index
    %11 = vector.load %arg5[%c0_6, %c0_7] : memref<4x1xf32, #tpu.memory_space<vmem>>, vector<4x1xf32>
    tpu.vector_store %arg5[%c0_6, %c0_7], %10 {strides = array<i32>} : memref<4x1xf32, #tpu.memory_space<vmem>>, vector<4x1xf32>,
    %c0_8 = arith.constant 0 : index
    %c0_9 = arith.constant 0 : index
    %12 = vector.load %arg6[%c0_8, %c0_9] : memref<4x1xf32, #tpu.memory_space<vmem>>, vector<4x1xf32>
    %13 = arith.mulf %6, %6 : vector<4x256xf32>
    %cst_10 = arith.constant dense<0.000000e+00> : vector<4xf32>
    %14 = vector.multi_reduction <add>, %13, %cst_10 [1] : vector<4x256xf32> to vector<4xf32>
    %15 = vector.shape_cast %14 : vector<4xf32> to vector<4x1xf32>
    %16 = arith.addf %12, %15 : vector<4x1xf32>
    %c0_11 = arith.constant 0 : index
    %c0_12 = arith.constant 0 : index
    %17 = vector.load %arg6[%c0_11, %c0_12] : memref<4x1xf32, #tpu.memory_space<vmem>>, vector<4x1xf32>
    tpu.vector_store %arg6[%c0_11, %c0_12], %16 {strides = array<i32>} : memref<4x1xf32, #tpu.memory_space<vmem>>, vector<4x1xf32>,
    %c1_i32 = arith.constant 1 : i32
    %18 = arith.cmpi eq, %arg0, %c1_i32 : i32
    %c0_i32_13 = arith.constant 0 : i32
    %19 = arith.cmpi eq, %arg1, %c0_i32_13 : i32
    %20 = arith.andi %18, %19 : i1
    %21 = arith.extui %20 : i1 to i32
    %c0_i32_14 = arith.constant 0 : i32
    %22 = arith.cmpi ne, %21, %c0_i32_14 : i32
    scf.if %22 {
      %c0_15 = arith.constant 0 : index
      %c0_16 = arith.constant 0 : index
      %23 = vector.load %arg5[%c0_15, %c0_16] : memref<4x1xf32, #tpu.memory_space<vmem>>, vector<4x1xf32>
      %cst_17 = arith.constant 0.001953125 : f32
      %24 = vector.broadcast %cst_17 : f32 to vector<4x1xf32>
      %25 = arith.mulf %23, %24 : vector<4x1xf32>
      %c0_18 = arith.constant 0 : index
      %c0_19 = arith.constant 0 : index
      %26 = vector.load %arg6[%c0_18, %c0_19] : memref<4x1xf32, #tpu.memory_space<vmem>>, vector<4x1xf32>
      %cst_20 = arith.constant 0.001953125 : f32
      %27 = vector.broadcast %cst_20 : f32 to vector<4x1xf32>
      %28 = arith.mulf %26, %27 : vector<4x1xf32>
      %29 = arith.mulf %25, %25 : vector<4x1xf32>
      %30 = arith.subf %28, %29 : vector<4x1xf32>
      %c0_21 = arith.constant 0 : index
      %c0_22 = arith.constant 0 : index
      %31 = vector.load %arg3[%c0_21, %c0_22] : memref<4x1xf32, #tpu.memory_space<vmem>>, vector<4x1xf32>
      tpu.vector_store %arg3[%c0_21, %c0_22], %25 {strides = array<i32>} : memref<4x1xf32, #tpu.memory_space<vmem>>, vector<4x1xf32>,
      %cst_23 = arith.constant 0.000000e+00 : f32
      %32 = vector.broadcast %cst_23 : f32 to vector<4x1xf32>
      %33 = arith.maximumf %30, %32 : vector<4x1xf32>
      %c0_24 = arith.constant 0 : index
      %c0_25 = arith.constant 0 : index
      %34 = vector.load %arg4[%c0_24, %c0_25] : memref<4x1xf32, #tpu.memory_space<vmem>>, vector<4x1xf32>
      tpu.vector_store %arg4[%c0_24, %c0_25], %33 {strides = array<i32>} : memref<4x1xf32, #tpu.memory_space<vmem>>, vector<4x1xf32>,
    } else {
    }
    return
  }
  func.func @transform_0(%arg0: i32, %arg1: i32) -> (i32, i32, i32) {
    %c0_i32 = arith.constant 0 : i32
    %c0_i32_0 = arith.constant 0 : i32
    return %arg0, %c0_i32, %arg1 : i32, i32, i32
  }
  func.func @transform_1(%arg0: i32, %arg1: i32) -> (i32, i32) {
    %c0_i32 = arith.constant 0 : i32
    %c0_i32_0 = arith.constant 0 : i32
    %c0_i32_1 = arith.constant 0 : i32
    return %c0_i32, %c0_i32_0 : i32, i32
  }
  func.func @transform_2(%arg0: i32, %arg1: i32) -> (i32, i32) {
    %c0_i32 = arith.constant 0 : i32
    %c0_i32_0 = arith.constant 0 : i32
    %c0_i32_1 = arith.constant 0 : i32
    return %c0_i32, %c0_i32_0 : i32, i32
  }
}

</mosaic_0001>

<llo_original>
// kernel: _bn_train_forward.2
$region0: #{_bn_train_forward.2}
  #allocation0 [shape = 'u32[]', space=smem, size = 0x4, offset = 0x4, fixed_abs, tag = 'smem constant byte address 0x4 - core index']
  #allocation1 [shape = 'u32[144,128]{1,0:T(1,128)}', space=vmem, size = 0x12000, scoped, tag = 'internal scratch']
  #allocation2 [shape = 'f32[4,1]{1,0:T(4,128)}', space=vmem, size = 0x800, scoped, tag = 'scratch operand']
  #allocation3 [shape = 'f32[4,1]{1,0:T(4,128)}', space=vmem, size = 0x800, scoped, tag = 'scratch operand']
  %s0 = inlined_call_operand.vmem [shape: f32[2,4,256], index: 0, kind: input, shape index: {}]
  %s1 = inlined_call_operand.vmem [shape: f32[4,1], index: 1, kind: output, shape index: {0}]
  %s2 = inlined_call_operand.vmem [shape: f32[4,1], index: 2, kind: output, shape index: {1}]
  %3 = xla_tuple %s1, %s2
  %s4 = sld [smem:[#allocation0]]
  $region53: #{_bn_train_forward.2} parent=0
    _
  %s6 = ssub.s32 1, %s4
  %s7 = scalar_select 0, %s6, %s4
  loop: start=0, step=1, limit=4
  $region2: #{_bn_train_forward.2} parent=0 // loop_pre_header
    _
  $region3: #{_bn_train_forward.2} parent=0 // loop_header
    %s9 = sphi 0, %s13
    %p10 = scmp.ge.s32.totalorder %s9, 4
    %s16 = sphi 0, %s28
    %s17 = sphi 0, %s24
    %s18 = sphi 0, %s16
    %s19 = sphi 0, %s17
    %s20 = sphi 0, %s18
    %s21 = sphi 0, %s19
    %s33 = sphi 0, %s35
    %s36 = sphi 0, %s33
    %s37 = sphi 0, %s36
    %s53 = sphi 0, %s37
    %s57 = sphi 0, %s57
    %s59 = sphi 0, %s57
    %s60 = sphi 0, %s59
    %s74 = sphi 0, %s60
    %s78 = sphi 0, %s78
    %s80 = sphi 0, %s78
    %s81 = sphi 0, %s80
    %s95 = sphi 0, %s81
  $region4: #{_bn_train_forward.2} parent=0 // loop_header_branch
    %12 = sbr.rel (%p10) target = $region8
  $region5: #{_bn_train_forward.2} parent=0 // loop_body
    %s14 = ssub.s32 %s9, 1
    %s15 = ssub.s32 %s9, 2
    %s22 = sadd.s32 1, %s17
    %p23 = scmp.ge.s32.totalorder %s22, 1
    %s24 = scalar_select %p23, 0, %s22
    %s25 = sadd.s32 1, %s16
    %s26 = scalar_select %p23, %s25, %s16
    %p27 = scmp.ge.s32.totalorder %s26, 2
    %s28 = scalar_select %p27, 0, %s26
    %s29 = ssub.s32 %s16, %s28
    %s30 = ssub.s32 %s17, %s24
    %s31 = sor.u32 %s29, %s30
    %p32 = scmp.eq.s32.totalorder %s31, 0
    %s34 = sadd.s32 %s33, 1
    %s35 = scalar_select %p32, %s33, %s34
    %p38 = pneg %p32
    %p39 = scmp.eq.s32.totalorder %s9, 1
    %p40 = por %p38, %p39
    %p41 = scmp.ne.s32.totalorder %s33, %s36
    %p42 = scmp.eq.s32.totalorder %s9, 0
    %p43 = por %p41, %p42
    %p44 = scmp.ne.s32.totalorder %s33, %s36
    %p45 = scmp.eq.s32.totalorder %s14, 1
    %p46 = por %p44, %p45
    %p47 = scmp.ne.s32.totalorder %s36, %s37
    %p48 = scmp.eq.s32.totalorder %s14, 0
    %p49 = por %p47, %p48
    %p50 = scmp.ne.s32.totalorder %s36, %s37
    %p51 = scmp.eq.s32.totalorder %s15, 1
    %p52 = por %p50, %p51
    %p54 = scmp.ne.s32.totalorder %s37, %s53
    %p55 = scmp.eq.s32.totalorder %s15, 0
    %p56 = por %p54, %p55
    %s58 = sadd.s32 %s57, 1
    %p61 = scmp.eq.s32.totalorder %s9, 1
    %p62 = scmp.ne.s32.totalorder %s57, %s59
    %p63 = scmp.eq.s32.totalorder %s9, 0
    %p64 = por %p62, %p63
    %p65 = scmp.ne.s32.totalorder %s57, %s59
    %p66 = scmp.eq.s32.totalorder %s14, 1
    %p67 = por %p65, %p66
    %p68 = scmp.ne.s32.totalorder %s59, %s60
    %p69 = scmp.eq.s32.totalorder %s14, 0
    %p70 = por %p68, %p69
    %p71 = scmp.ne.s32.totalorder %s59, %s60
    %p72 = scmp.eq.s32.totalorder %s15, 1
    %p73 = por %p71, %p72
    %p75 = scmp.ne.s32.totalorder %s60, %s74
    %p76 = scmp.eq.s32.totalorder %s15, 0
    %p77 = por %p75, %p76
    %s79 = sadd.s32 %s78, 1
    %p82 = scmp.eq.s32.totalorder %s9, 1
    %p83 = scmp.ne.s32.totalorder %s78, %s80
    %p84 = scmp.eq.s32.totalorder %s9, 0
    %p85 = por %p83, %p84
    %p86 = scmp.ne.s32.totalorder %s78, %s80
    %p87 = scmp.eq.s32.totalorder %s14, 1
    %p88 = por %p86, %p87
    %p89 = scmp.ne.s32.totalorder %s80, %s81
    %p90 = scmp.eq.s32.totalorder %s14, 0
    %p91 = por %p89, %p90
    %p92 = scmp.ne.s32.totalorder %s80, %s81
    %p93 = scmp.eq.s32.totalorder %s15, 1
    %p94 = por %p92, %p93
    %p96 = scmp.ne.s32.totalorder %s81, %s95
    %p97 = scmp.eq.s32.totalorder %s15, 0
    %p98 = por %p96, %p97
    %p99 = scmp.le.s32.totalorder 1, %s9
    %p100 = scmp.lt.s32.totalorder %s9, 3
    %p101 = pnand %p99, %p100
    %p102 = pneg %p101
    // Predicated region
    $region9: #{_bn_train_forward.2} parent=5 // pred_check
      _
    $region10: #{_bn_train_forward.2} parent=5 // pred_check_branch
      %104 = sbr.rel (%p101) target = $region12
    $region11: #{_bn_train_forward.2} parent=5 // pred_region
      %s105 = ssub.s32 %s9, 1
    $region12: #{_bn_train_forward.2} parent=5 // pred_fallthru
      _
    %p106 = scmp.lt.s32.totalorder %s9, 2
    // Predicated region
    $region13: #{_bn_train_forward.2} parent=5 // pred_check
      %p107 = pneg %p106
    $region14: #{_bn_train_forward.2} parent=5 // pred_check_branch
      %109 = sbr.rel (%p107) target = $region16
    $region15: #{_bn_train_forward.2} parent=5 // pred_region
      // Predicated region
      $region17: #{_bn_train_forward.2} parent=15 // pred_check
        %p110 = pneg %p43
      $region18: #{_bn_train_forward.2} parent=15 // pred_check_branch
        %112 = sbr.rel (%p110) target = $region20
      $region19: #{_bn_train_forward.2} parent=15 // pred_region
        %s113 = smul.u32 2, %s17
        %p114 = scmp.lt.s32.totalorder %s16, 1
        %s115 = scalar_select %p114, %s16, 1
        %p116 = scmp.lt.s32.totalorder %s113, 1
        %s117 = scalar_select %p116, %s113, 1
        %s118 = smul.addr %s115, 2
        %s119 = sadd.s32 %s117, %s118
        %s120 = smul.addr %s119, 4
        %s121 = scalar_lea.vmem %s0, %s120
        %s122 = smul.u32 2, %s17
      $region20: #{_bn_train_forward.2} parent=15 // pred_fallthru
        _
    $region16: #{_bn_train_forward.2} parent=5 // pred_fallthru
      _
    %p123 = scmp.le.s32.totalorder 1, %s9
    %p124 = scmp.lt.s32.totalorder %s9, 3
    %p125 = pnand %p123, %p124
    %p126 = pneg %p125
    // Predicated region
    $region21: #{_bn_train_forward.2} parent=5 // pred_check
      _
    $region22: #{_bn_train_forward.2} parent=5 // pred_check_branch
      %128 = sbr.rel (%p125) target = $region24
    $region23: #{_bn_train_forward.2} parent=5 // pred_region
      %s129 = ssub.s32 %s9, 1
      %s130 = smul.u32 2, %s19
      %p131 = scmp.lt.s32.totalorder %s18, 1
      %s132 = scalar_select %p131, %s18, 1
      %p133 = scmp.lt.s32.totalorder %s130, 1
      %s134 = scalar_select %p133, %s130, 1
      %s135 = smul.addr %s132, 2
      %s136 = sadd.s32 %s134, %s135
      %s137 = smul.addr %s136, 4
      %s138 = scalar_lea.vmem %s0, %s137
      %p139 = pneg %p49
      %p140 = pneg %p46
      %p141 = pneg %p70
      %p142 = pneg %p67
      %p143 = pneg %p91
      %p144 = pneg %p88
      %s145 = smul.u32 2, %s19
      %p146 = scmp.lt.s32.totalorder %s18, 1
      %s147 = scalar_select %p146, %s18, 1
      %p148 = scmp.lt.s32.totalorder %s145, 1
      %s149 = scalar_select %p148, %s145, 1
      %s150 = smul.addr %s147, 2
      %s151 = sadd.s32 %s149, %s150
      %s152 = smul.addr %s151, 4
      %s153 = scalar_lea.vmem %s0, %s152
      %s154 = smul.u32 2, %s19
      %p155 = scmp.eq.s32.totalorder %s18, 0
      %p156 = scmp.eq.s32.totalorder %s19, 0
      %p157 = pnand %p155, %p156
      %p158 = pneg %p157
      // Predicated region
      $region25: #{_bn_train_forward.2} parent=23 // pred_check
        _
      $region26: #{_bn_train_forward.2} parent=23 // pred_check_branch
        %160 = sbr.rel (%p157) target = $region28
      $region27: #{_bn_train_forward.2} parent=23 // pred_region
        %vm161 = vcmask 3072
        %162 = vst.msk [vmem:[#allocation2] sm:$0xf] %vm161, 0.0
        %163 = vst.msk [vmem:[#allocation3] sm:$0xf] %vm161, 0.0
      $region28: #{_bn_train_forward.2} parent=23 // pred_fallthru
        _
      %v164 = vld [vmem:[%s153] sm:$0xff]
      %v165 = vld [vmem:[#allocation2] sm:$0xf]
      %v167 = vcombine.high %v164, %v164
      %vm169 = vcmask 1043456
      %v170 = vsel %vm169, %v164, 0.0
      %v171 = vsel %vm169, %v167, 0.0
      %v172 = vadd.f32 %v170, %v171
      %173 = vadd.xlane.f32.xlu0 %v172
      %v174 = vpop.xlane.xlu0 %173
      %v175 = vadd.f32 %v165, %v174
      %vm176 = vcmask 3072
      %177 = vst.msk [vmem:[#allocation2] sm:$0xf] %vm176, %v175
      %v178 = vld [vmem:[#allocation3] sm:$0xf]
      %v179 = vmul.f32 %v164, %v164
      %v181 = vcombine.high %v179, %v179
      %v183 = vsel %vm169, %v179, 0.0
      %v184 = vsel %vm169, %v181, 0.0
      %v185 = vadd.f32 %v183, %v184
      %186 = vadd.xlane.f32.xlu0 %v185
      %v187 = vpop.xlane.xlu0 %186
      %v188 = vadd.f32 %v178, %v187
      %189 = vst.msk [vmem:[#allocation3] sm:$0xf] %vm176, %v188
      %p190 = scmp.eq.s32.totalorder %s18, 1
      %p191 = pnand %p190, %p156
      %p192 = pneg %p191
      // Predicated region
      $region29: #{_bn_train_forward.2} parent=23 // pred_check
        _
      $region30: #{_bn_train_forward.2} parent=23 // pred_check_branch
        %194 = sbr.rel (%p191) target = $region32
      $region31: #{_bn_train_forward.2} parent=23 // pred_region
        %v195 = vld [vmem:[#allocation2] sm:$0xf]
        %v196 = vmul.f32 %v195, 0.001953125
        %v197 = vld [vmem:[#allocation3] sm:$0xf]
        %v198 = vmul.f32 %v197, 0.001953125
        %v199 = vmul.f32 %v196, %v196
        %v200 = vsub.f32 %v198, %v199
        %201 = vst.msk [vmem:[%s1] sm:$0xf] %vm176, %v196
        %v202 = vmax.f32 %v200, 0.0
        %203 = vst.msk [vmem:[%s2] sm:$0xf] %vm176, %v202
      $region32: #{_bn_train_forward.2} parent=23 // pred_fallthru
        _
      // Predicated region
      $region33: #{_bn_train_forward.2} parent=23 // pred_check
        %p204 = pneg %p67
      $region34: #{_bn_train_forward.2} parent=23 // pred_check_branch
        %206 = sbr.rel (%p204) target = $region36
      $region35: #{_bn_train_forward.2} parent=23 // pred_region
        _
      $region36: #{_bn_train_forward.2} parent=23 // pred_fallthru
        _
      // Predicated region
      $region37: #{_bn_train_forward.2} parent=23 // pred_check
        %p207 = pneg %p88
      $region38: #{_bn_train_forward.2} parent=23 // pred_check_branch
        %209 = sbr.rel (%p207) target = $region40
      $region39: #{_bn_train_forward.2} parent=23 // pred_region
        _
      $region40: #{_bn_train_forward.2} parent=23 // pred_fallthru
        _
      // Predicated region
      $region41: #{_bn_train_forward.2} parent=23 // pred_check
        %p210 = pneg %p67
      $region42: #{_bn_train_forward.2} parent=23 // pred_check_branch
        %212 = sbr.rel (%p210) target = $region44
      $region43: #{_bn_train_forward.2} parent=23 // pred_region
        _
      $region44: #{_bn_train_forward.2} parent=23 // pred_fallthru
        _
      // Predicated region
      $region45: #{_bn_train_forward.2} parent=23 // pred_check
        %p213 = pneg %p88
      $region46: #{_bn_train_forward.2} parent=23 // pred_check_branch
        %215 = sbr.rel (%p213) target = $region48
      $region47: #{_bn_train_forward.2} parent=23 // pred_region
        _
      $region48: #{_bn_train_forward.2} parent=23 // pred_fallthru
        _
    $region24: #{_bn_train_forward.2} parent=5 // pred_fallthru
      _
    %p216 = scmp.le.s32.totalorder 2, %s9
    // Predicated region
    $region49: #{_bn_train_forward.2} parent=5 // pred_check
      %p217 = pneg %p216
    $region50: #{_bn_train_forward.2} parent=5 // pred_check_branch
      %219 = sbr.rel (%p217) target = $region52
    $region51: #{_bn_train_forward.2} parent=5 // pred_region
      %s220 = ssub.s32 %s9, 2
    $region52: #{_bn_train_forward.2} parent=5 // pred_fallthru
      _
  $region6: #{_bn_train_forward.2} parent=0 // loop_footer
    %s13 = sadd.s32 1, %s9
  $region7: #{_bn_train_forward.2} parent=0 // loop_footer_branch
    %8 = sbr.rel target = $region3
  $region8: #{_bn_train_forward.2} parent=0 // loop_exit
    _

// kernel: _bn_train_forward.3
$region0: #{_bn_train_forward.3}
  #allocation0 [shape = 'u32[]', space=smem, size = 0x4, offset = 0x4, fixed_abs, tag = 'smem constant byte address 0x4 - core index']
  #allocation1 [shape = 'u32[144,128]{1,0:T(1,128)}', space=vmem, size = 0x12000, scoped, tag = 'internal scratch']
  %s0 = inlined_call_operand.vmem [shape: f32[2,4,256], index: 0, kind: input, shape index: {}]
  %s1 = inlined_call_operand.vmem [shape: f32[4,1], index: 1, kind: input, shape index: {}]
  %s2 = inlined_call_operand.vmem [shape: f32[4,1], index: 2, kind: input, shape index: {}]
  %s3 = inlined_call_operand.vmem [shape: f32[2,4,256], index: 3, kind: output, shape index: {}]
  %s4 = sld [smem:[#allocation0]]
  $region45: #{_bn_train_forward.3} parent=0
    _
  %s6 = ssub.s32 1, %s4
  %s7 = scalar_select 0, %s6, %s4
  loop: start=0, step=1, limit=4
  $region2: #{_bn_train_forward.3} parent=0 // loop_pre_header
    _
  $region3: #{_bn_train_forward.3} parent=0 // loop_header
    %s9 = sphi 0, %s13
    %p10 = scmp.ge.s32.totalorder %s9, 4
    %s16 = sphi 0, %s28
    %s17 = sphi 0, %s24
    %s18 = sphi 0, %s16
    %s19 = sphi 0, %s17
    %s20 = sphi 0, %s18
    %s21 = sphi 0, %s19
    %s33 = sphi 0, %s35
    %s36 = sphi 0, %s33
    %s37 = sphi 0, %s36
    %s53 = sphi 0, %s37
    %s57 = sphi 0, %s57
    %s59 = sphi 0, %s57
    %s60 = sphi 0, %s59
    %s74 = sphi 0, %s60
    %s78 = sphi 0, %s78
    %s80 = sphi 0, %s78
    %s81 = sphi 0, %s80
    %s95 = sphi 0, %s81
    %s103 = sphi 0, %s105
    %s106 = sphi 0, %s103
    %s107 = sphi 0, %s106
    %s123 = sphi 0, %s107
  $region4: #{_bn_train_forward.3} parent=0 // loop_header_branch
    %12 = sbr.rel (%p10) target = $region8
  $region5: #{_bn_train_forward.3} parent=0 // loop_body
    %s14 = ssub.s32 %s9, 1
    %s15 = ssub.s32 %s9, 2
    %s22 = sadd.s32 1, %s17
    %p23 = scmp.ge.s32.totalorder %s22, 1
    %s24 = scalar_select %p23, 0, %s22
    %s25 = sadd.s32 1, %s16
    %s26 = scalar_select %p23, %s25, %s16
    %p27 = scmp.ge.s32.totalorder %s26, 2
    %s28 = scalar_select %p27, 0, %s26
    %s29 = ssub.s32 %s16, %s28
    %s30 = ssub.s32 %s17, %s24
    %s31 = sor.u32 %s29, %s30
    %p32 = scmp.eq.s32.totalorder %s31, 0
    %s34 = sadd.s32 %s33, 1
    %s35 = scalar_select %p32, %s33, %s34
    %p38 = pneg %p32
    %p39 = scmp.eq.s32.totalorder %s9, 1
    %p40 = por %p38, %p39
    %p41 = scmp.ne.s32.totalorder %s33, %s36
    %p42 = scmp.eq.s32.totalorder %s9, 0
    %p43 = por %p41, %p42
    %p44 = scmp.ne.s32.totalorder %s33, %s36
    %p45 = scmp.eq.s32.totalorder %s14, 1
    %p46 = por %p44, %p45
    %p47 = scmp.ne.s32.totalorder %s36, %s37
    %p48 = scmp.eq.s32.totalorder %s14, 0
    %p49 = por %p47, %p48
    %p50 = scmp.ne.s32.totalorder %s36, %s37
    %p51 = scmp.eq.s32.totalorder %s15, 1
    %p52 = por %p50, %p51
    %p54 = scmp.ne.s32.totalorder %s37, %s53
    %p55 = scmp.eq.s32.totalorder %s15, 0
    %p56 = por %p54, %p55
    %s58 = sadd.s32 %s57, 1
    %p61 = scmp.eq.s32.totalorder %s9, 1
    %p62 = scmp.ne.s32.totalorder %s57, %s59
    %p63 = scmp.eq.s32.totalorder %s9, 0
    %p64 = por %p62, %p63
    %p65 = scmp.ne.s32.totalorder %s57, %s59
    %p66 = scmp.eq.s32.totalorder %s14, 1
    %p67 = por %p65, %p66
    %p68 = scmp.ne.s32.totalorder %s59, %s60
    %p69 = scmp.eq.s32.totalorder %s14, 0
    %p70 = por %p68, %p69
    %p71 = scmp.ne.s32.totalorder %s59, %s60
    %p72 = scmp.eq.s32.totalorder %s15, 1
    %p73 = por %p71, %p72
    %p75 = scmp.ne.s32.totalorder %s60, %s74
    %p76 = scmp.eq.s32.totalorder %s15, 0
    %p77 = por %p75, %p76
    %s79 = sadd.s32 %s78, 1
    %p82 = scmp.eq.s32.totalorder %s9, 1
    %p83 = scmp.ne.s32.totalorder %s78, %s80
    %p84 = scmp.eq.s32.totalorder %s9, 0
    %p85 = por %p83, %p84
    %p86 = scmp.ne.s32.totalorder %s78, %s80
    %p87 = scmp.eq.s32.totalorder %s14, 1
    %p88 = por %p86, %p87
    %p89 = scmp.ne.s32.totalorder %s80, %s81
    %p90 = scmp.eq.s32.totalorder %s14, 0
    %p91 = por %p89, %p90
    %p92 = scmp.ne.s32.totalorder %s80, %s81
    %p93 = scmp.eq.s32.totalorder %s15, 1
    %p94 = por %p92, %p93
    %p96 = scmp.ne.s32.totalorder %s81, %s95
    %p97 = scmp.eq.s32.totalorder %s15, 0
    %p98 = por %p96, %p97
    %s99 = ssub.s32 %s16, %s28
    %s100 = ssub.s32 %s17, %s24
    %s101 = sor.u32 %s99, %s100
    %p102 = scmp.eq.s32.totalorder %s101, 0
    %s104 = sadd.s32 %s103, 1
    %s105 = scalar_select %p102, %s103, %s104
    %p108 = pneg %p102
    %p109 = scmp.eq.s32.totalorder %s9, 1
    %p110 = por %p108, %p109
    %p111 = scmp.ne.s32.totalorder %s103, %s106
    %p112 = scmp.eq.s32.totalorder %s9, 0
    %p113 = por %p111, %p112
    %p114 = scmp.ne.s32.totalorder %s103, %s106
    %p115 = scmp.eq.s32.totalorder %s14, 1
    %p116 = por %p114, %p115
    %p117 = scmp.ne.s32.totalorder %s106, %s107
    %p118 = scmp.eq.s32.totalorder %s14, 0
    %p119 = por %p117, %p118
    %p120 = scmp.ne.s32.totalorder %s106, %s107
    %p121 = scmp.eq.s32.totalorder %s15, 1
    %p122 = por %p120, %p121
    %p124 = scmp.ne.s32.totalorder %s107, %s123
    %p125 = scmp.eq.s32.totalorder %s15, 0
    %p126 = por %p124, %p125
    %p127 = scmp.le.s32.totalorder 1, %s9
    %p128 = scmp.lt.s32.totalorder %s9, 3
    %p129 = pnand %p127, %p128
    %p130 = pneg %p129
    // Predicated region
    $region9: #{_bn_train_forward.3} parent=5 // pred_check
      _
    $region10: #{_bn_train_forward.3} parent=5 // pred_check_branch
      %132 = sbr.rel (%p129) target = $region12
    $region11: #{_bn_train_forward.3} parent=5 // pred_region
      %s133 = ssub.s32 %s9, 1
      // Predicated region
      $region13: #{_bn_train_forward.3} parent=11 // pred_check
        %p134 = pneg %p70
      $region14: #{_bn_train_forward.3} parent=11 // pred_check_branch
        %136 = sbr.rel (%p134) target = $region16
      $region15: #{_bn_train_forward.3} parent=11 // pred_region
        _
      $region16: #{_bn_train_forward.3} parent=11 // pred_fallthru
        _
      // Predicated region
      $region17: #{_bn_train_forward.3} parent=11 // pred_check
        %p137 = pneg %p91
      $region18: #{_bn_train_forward.3} parent=11 // pred_check_branch
        %139 = sbr.rel (%p137) target = $region20
      $region19: #{_bn_train_forward.3} parent=11 // pred_region
        _
      $region20: #{_bn_train_forward.3} parent=11 // pred_fallthru
        _
    $region12: #{_bn_train_forward.3} parent=5 // pred_fallthru
      _
    %p140 = scmp.lt.s32.totalorder %s9, 2
    // Predicated region
    $region21: #{_bn_train_forward.3} parent=5 // pred_check
      %p141 = pneg %p140
    $region22: #{_bn_train_forward.3} parent=5 // pred_check_branch
      %143 = sbr.rel (%p141) target = $region24
    $region23: #{_bn_train_forward.3} parent=5 // pred_region
      // Predicated region
      $region25: #{_bn_train_forward.3} parent=23 // pred_check
        %p144 = pneg %p43
      $region26: #{_bn_train_forward.3} parent=23 // pred_check_branch
        %146 = sbr.rel (%p144) target = $region28
      $region27: #{_bn_train_forward.3} parent=23 // pred_region
        %s147 = smul.u32 2, %s17
        %p148 = scmp.lt.s32.totalorder %s16, 1
        %s149 = scalar_select %p148, %s16, 1
        %p150 = scmp.lt.s32.totalorder %s147, 1
        %s151 = scalar_select %p150, %s147, 1
        %s152 = smul.addr %s149, 2
        %s153 = sadd.s32 %s151, %s152
        %s154 = smul.addr %s153, 4
        %s155 = scalar_lea.vmem %s0, %s154
        %s156 = smul.u32 2, %s17
      $region28: #{_bn_train_forward.3} parent=23 // pred_fallthru
        _
    $region24: #{_bn_train_forward.3} parent=5 // pred_fallthru
      _
    %p157 = scmp.le.s32.totalorder 1, %s9
    %p158 = scmp.lt.s32.totalorder %s9, 3
    %p159 = pnand %p157, %p158
    %p160 = pneg %p159
    // Predicated region
    $region29: #{_bn_train_forward.3} parent=5 // pred_check
      _
    $region30: #{_bn_train_forward.3} parent=5 // pred_check_branch
      %162 = sbr.rel (%p159) target = $region32
    $region31: #{_bn_train_forward.3} parent=5 // pred_region
      %s163 = ssub.s32 %s9, 1
      %s164 = smul.u32 2, %s19
      %p165 = scmp.lt.s32.totalorder %s18, 1
      %s166 = scalar_select %p165, %s18, 1
      %p167 = scmp.lt.s32.totalorder %s164, 1
      %s168 = scalar_select %p167, %s164, 1
      %s169 = smul.addr %s166, 2
      %s170 = sadd.s32 %s168, %s169
      %s171 = smul.addr %s170, 4
      %s172 = scalar_lea.vmem %s0, %s171
      %p173 = pneg %p49
      %p174 = pneg %p46
      %p175 = pneg %p70
      %p176 = pneg %p67
      %p177 = pneg %p91
      %p178 = pneg %p88
      %p179 = pneg %p119
      %p180 = pneg %p116
      %s181 = smul.u32 2, %s19
      %p182 = scmp.lt.s32.totalorder %s18, 1
      %s183 = scalar_select %p182, %s18, 1
      %p184 = scmp.lt.s32.totalorder %s181, 1
      %s185 = scalar_select %p184, %s181, 1
      %s186 = smul.addr %s183, 2
      %s187 = sadd.s32 %s185, %s186
      %s188 = smul.addr %s187, 4
      %s189 = scalar_lea.vmem %s3, %s188
      %s190 = smul.u32 2, %s19
      %p191 = scmp.lt.s32.totalorder %s18, 1
      %s192 = scalar_select %p191, %s18, 1
      %p193 = scmp.lt.s32.totalorder %s190, 1
      %s194 = scalar_select %p193, %s190, 1
      %s195 = smul.addr %s192, 2
      %s196 = sadd.s32 %s194, %s195
      %s197 = smul.addr %s196, 4
      %s198 = scalar_lea.vmem %s0, %s197
      %s199 = smul.u32 2, %s19
      %s200 = smul.u32 2, %s19
      %p201 = scmp.lt.s32.totalorder %s18, 1
      %s202 = scalar_select %p201, %s18, 1
      %p203 = scmp.lt.s32.totalorder %s200, 1
      %s204 = scalar_select %p203, %s200, 1
      %s205 = smul.addr %s202, 2
      %s206 = sadd.s32 %s204, %s205
      %s207 = smul.addr %s206, 4
      %s208 = scalar_lea.vmem %s3, %s207
      %s209 = smul.u32 2, %s19
      %v210 = vld [vmem:[%s1] sm:$0xf]
      %v211 = vld [vmem:[%s2] sm:$0xf]
      %v212 = vadd.f32 %v211, 1e-05
      %v213 = vrsqrt.pop %v212
      %v214 = vld [vmem:[%s198] sm:$0xff]
      %216 = vset.pattern.permute.xlu0 0
      %217 = vperm.xlu0 %216, %v210
      %v218 = vpop.permute.xlu0 %217
      %v220 = vunpack.c.l.s4 839922192
      %v221 = vunpack.c.0.s8 %v220
      %v222 = vlaneseq
      %v223 = vshrl.u32 %v222, 7
      %v224 = vsub.s32 %v221, %v223
      %v225 = vrot.slane %v218, %v224
      %v227 = vsub.f32 %v214, %v225
      %229 = vset.pattern.permute.xlu0 0
      %230 = vperm.xlu0 %229, %v213
      %v231 = vpop.permute.xlu0 %230
      %v233 = vunpack.c.l.s4 839922192
      %v234 = vunpack.c.0.s8 %v233
      %v235 = vlaneseq
      %v236 = vshrl.u32 %v235, 7
      %v237 = vsub.s32 %v234, %v236
      %v238 = vrot.slane %v231, %v237
      %v240 = vmul.f32 %v227, %v238
      %241 = vst [vmem:[%s208] sm:$0xff] %v240
      %s242 = smul.u32 2, %s19
      %p243 = scmp.lt.s32.totalorder %s18, 1
      %s244 = scalar_select %p243, %s18, 1
      %p245 = scmp.lt.s32.totalorder %s242, 1
      %s246 = scalar_select %p245, %s242, 1
      %s247 = smul.addr %s244, 2
      %s248 = sadd.s32 %s246, %s247
      %s249 = smul.addr %s248, 4
      %s250 = scalar_lea.vmem %s3, %s249
      // Predicated region
      $region33: #{_bn_train_forward.3} parent=31 // pred_check
        %p251 = pneg %p116
      $region34: #{_bn_train_forward.3} parent=31 // pred_check_branch
        %253 = sbr.rel (%p251) target = $region36
      $region35: #{_bn_train_forward.3} parent=31 // pred_region
        %s254 = smul.u32 2, %s19
      $region36: #{_bn_train_forward.3} parent=31 // pred_fallthru
        _
    $region32: #{_bn_train_forward.3} parent=5 // pred_fallthru
      _
    %p255 = scmp.le.s32.totalorder 2, %s9
    // Predicated region
    $region37: #{_bn_train_forward.3} parent=5 // pred_check
      %p256 = pneg %p255
    $region38: #{_bn_train_forward.3} parent=5 // pred_check_branch
      %258 = sbr.rel (%p256) target = $region40
    $region39: #{_bn_train_forward.3} parent=5 // pred_region
      %s259 = ssub.s32 %s9, 2
      // Predicated region
      $region41: #{_bn_train_forward.3} parent=39 // pred_check
        %p260 = pneg %p122
      $region42: #{_bn_train_forward.3} parent=39 // pred_check_branch
        %262 = sbr.rel (%p260) target = $region44
      $region43: #{_bn_train_forward.3} parent=39 // pred_region
        %s263 = smul.u32 2, %s21
        %p264 = scmp.lt.s32.totalorder %s20, 1
        %s265 = scalar_select %p264, %s20, 1
        %p266 = scmp.lt.s32.totalorder %s263, 1
        %s267 = scalar_select %p266, %s263, 1
        %s268 = smul.addr %s265, 2
        %s269 = sadd.s32 %s267, %s268
        %s270 = smul.addr %s269, 4
        %s271 = scalar_lea.vmem %s3, %s270
      $region44: #{_bn_train_forward.3} parent=39 // pred_fallthru
        _
    $region40: #{_bn_train_forward.3} parent=5 // pred_fallthru
      _
  $region6: #{_bn_train_forward.3} parent=0 // loop_footer
    %s13 = sadd.s32 1, %s9
  $region7: #{_bn_train_forward.3} parent=0 // loop_footer_branch
    %8 = sbr.rel target = $region3
  $region8: #{_bn_train_forward.3} parent=0 // loop_exit
    _

</llo_original>
